<compile_context>
chip_gen: v6e
topology: v6e:2x2x1
jax: 0.10.0
libtpu: 0.0.40
codegen_flags: <defaults>
</compile_context>

<pallas_src>
import jax
import jax.numpy as jnp
from jax import lax
from jax.experimental import pallas as pl
from jax.experimental.pallas import tpu as pltpu

NUM_CLASSES = 10
K_PAD = 128        # lane-dense (multiple-of-128) padded class axis
NEG_INF = -1e30    # folded into padded bias columns (masks them out of softmax)


# ---------------------------------------------------------------------------
# Kernels
# ---------------------------------------------------------------------------
def _vanilla_train_kernel(n_valid_ref, x_ref, w_ref, b_ref, tgt_ref,
                          logits_ref, loss_ref, acc_ref):
    # Grid: (batch tiles ["parallel"], D tiles ["arbitrary", last]).
    # x_ref: (TN, TD) bf16 | w_ref: (TD, 128) bf16 | b_ref: (1, 128) f32
    # tgt_ref: (TN, 1) i32 | logits_ref: (TN, 128) bf16
    # loss_ref: (1, 1) f32 SMEM | acc_ref: (TN, 128) f32 VMEM scratch
    i = pl.program_id(0)
    k = pl.program_id(1)

    @pl.when(k == 0)
    def _():
        # Seed the accumulator with the bias (padded class columns = -1e30).
        acc_ref[...] = jnp.zeros_like(acc_ref) + b_ref[...]

    # Student forward (partial): logits += x_tile @ W_tile (MXU, f32 accum).
    acc_ref[...] += jnp.dot(x_ref[...], w_ref[...],
                            preferred_element_type=jnp.float32)

    @pl.when(k == pl.num_programs(1) - 1)
    def _():
        logits = acc_ref[...]                               # (TN, 128) f32
        logits_ref[...] = logits.astype(logits_ref.dtype)   # bf16 writeback

        tn, kp = logits.shape
        # Softmax cross-entropy.  Padded class columns hold -1e30 from the
        # bias, so exp(shifted) underflows to 0 there — no explicit mask.
        m = jnp.max(logits, axis=-1, keepdims=True)
        shifted = logits - m
        lse = jnp.log(jnp.sum(jnp.exp(shifted), axis=-1, keepdims=True))

        class_ids = lax.broadcasted_iota(jnp.int32, (tn, kp), 1)
        tgt_shift = jnp.sum(
            jnp.where(class_ids == tgt_ref[...], shifted, 0.0),
            axis=-1, keepdims=True)                          # (TN, 1)
        nll = lse - tgt_shift                                # (TN, 1)

        # Mask padded tail rows; the wrapper divides by the true batch size.
        row_ids = i * tn + lax.broadcasted_iota(jnp.int32, (tn, 1), 0)
        valid = (row_ids < n_valid_ref[0]).astype(jnp.float32)
        loss_ref[0, 0] = jnp.sum(nll * valid)


def _vanilla_test_kernel(x_ref, w_ref, b_ref, logits_ref, acc_ref):
    k = pl.program_id(1)

    @pl.when(k == 0)
    def _():
        acc_ref[...] = jnp.zeros_like(acc_ref) + b_ref[...]

    acc_ref[...] += jnp.dot(x_ref[...], w_ref[...],
                            preferred_element_type=jnp.float32)

    @pl.when(k == pl.num_programs(1) - 1)
    def _():
        logits_ref[...] = acc_ref[...].astype(logits_ref.dtype)


# ---------------------------------------------------------------------------
# Tiling / input preparation
# ---------------------------------------------------------------------------
def _round_up(x, m):
    return -(-x // m) * m


def _vmem_capacity_bytes():
    try:
        info = pltpu.get_tpu_info()
        cap = getattr(info, "vmem_capacity_bytes", None)
        if cap:
            return int(cap)
    except Exception:
        pass
    return 64 * 1024 * 1024   # conservative (v7x-sized) fallback


def _choose_tiles(n, d, max_td=None):
    """Generation-aware tile choice: (tn, n_pad, td, d_pad, vmem_limit)."""
    cap = _vmem_capacity_bytes()
    budget = max(12 << 20, min(int(cap * 0.6), 64 << 20))          # plan budget
    vmem_limit = int(min(max(int(cap * 0.8), budget + (4 << 20)), 100 << 20))

    # D tile: W tile is (td, 128) bf16 and double-buffered; keep <= budget/4.
    d_pad128 = _round_up(d, 128)
    td_cap = max(128, ((budget // 4) // (2 * K_PAD * 2)) // 128 * 128)
    td = min(d_pad128, td_cap, 16 * 1024)
    if max_td is not None:
        td = min(td, max(128, (max_td // 128) * 128))
    d_pad = _round_up(d_pad128, td)

    # Batch tile: remaining budget over per-row cost (2x bf16 x tile,
    # 2x bf16 logits tile, f32 accumulator, targets).
    fixed = 2 * (td * K_PAD * 2) + (K_PAD * 4)
    per_row = 2 * (td * 2) + 2 * (K_PAD * 2) + (K_PAD * 4) + 2 * 4
    tn = int(max(8, min(1024, (budget - fixed) // per_row)))
    tn = (tn // 8) * 8
    n_pad8 = _round_up(n, 8)
    tn = min(tn, n_pad8)
    # Keep >= 2 batch tiles when possible so the "parallel" axis can shard
    # across TensorCores (v7x has 2 TCs per chip).
    if n_pad8 >= 16:
        tn = min(tn, _round_up(n_pad8 // 2, 8))
    n_pad = _round_up(n, tn)
    return tn, n_pad, td, d_pad, vmem_limit


def _prepare_inputs(image, w, b, d_pad):
    n = image.shape[0]
    d = w.shape[0]
    x = image.reshape(n, -1).astype(jnp.bfloat16)          # NCHW -> (N, D), bf16
    if d_pad != d:
        x = jnp.pad(x, ((0, 0), (0, d_pad - d)))
    w_p = jnp.zeros((d_pad, K_PAD), jnp.bfloat16).at[:d, :NUM_CLASSES].set(
        w.astype(jnp.bfloat16))
    # Fold the padded-class mask into the bias: columns >= NUM_CLASSES get a
    # large negative, so the in-kernel softmax needs no explicit mask.
    # Consumers must slice logits to NUM_CLASSES (the wrappers do).
    b_p = jnp.full((1, K_PAD), NEG_INF, jnp.float32).at[0, :NUM_CLASSES].set(
        b.reshape(-1).astype(jnp.float32))
    return x, w_p, b_p


def _cost_estimate(n_pad, d_pad, n_batch_tiles, train):
    return pl.CostEstimate(
        flops=2 * n_pad * d_pad * K_PAD,
        transcendentals=(n_pad * K_PAD) if train else 0,
        bytes_accessed=(n_pad * d_pad * 2                     # x (bf16)
                        + n_batch_tiles * d_pad * K_PAD * 2   # W per batch tile
                        + n_pad * K_PAD * 2                   # logits (bf16)
                        + n_pad * 8),                         # targets / partials
    )


# ---------------------------------------------------------------------------
# Wrappers (Vanilla.forward_train / forward_test / forward)
# ---------------------------------------------------------------------------
def vanilla_forward_train(image, target, w, b, *, block_d=None):
    """Vanilla.forward_train: returns (logits_student, {'ce': loss})."""
    n = image.shape[0]
    d = w.shape[0]
    tn, n_pad, td, d_pad, vmem_limit = _choose_tiles(n, d, max_td=block_d)
    gi, gk = n_pad // tn, d_pad // td

    x, w_p, b_p = _prepare_inputs(image, w, b, d_pad)
    tgt = target.astype(jnp.int32)
    if n_pad != n:
        x = jnp.pad(x, ((0, n_pad - n), (0, 0)))
        tgt = jnp.pad(tgt, (0, n_pad - n))
    tgt = tgt.reshape(n_pad, 1)
    # SMEM scalar prefetch: no Mosaic recompile for a different valid count.
    n_valid = jnp.array([n], jnp.int32)

    grid_spec = pltpu.PrefetchScalarGridSpec(
        num_scalar_prefetch=1,
        grid=(gi, gk),
        in_specs=[
            pl.BlockSpec((tn, td), lambda i, k, nv: (i, k)),       # x
            pl.BlockSpec((td, K_PAD), lambda i, k, nv: (k, 0)),    # W (D-tiled)
            pl.BlockSpec((1, K_PAD), lambda i, k, nv: (0, 0)),     # bias (resident)
            pl.BlockSpec((tn, 1), lambda i, k, nv: (i, 0)),        # targets
        ],
        out_specs=(
            pl.BlockSpec((tn, K_PAD), lambda i, k, nv: (i, 0)),    # logits (bf16)
            pl.BlockSpec((1, 1), lambda i, k, nv: (i, 0),
                         memory_space=pltpu.MemorySpace.SMEM),     # CE partial
        ),
        scratch_shapes=[pltpu.VMEM((tn, K_PAD), jnp.float32)],     # f32 accumulator
    )

    logits_pad, loss_parts = pl.pallas_call(
        _vanilla_train_kernel,
        grid_spec=grid_spec,
        out_shape=(
            jax.ShapeDtypeStruct((n_pad, K_PAD), jnp.bfloat16),
            jax.ShapeDtypeStruct((gi, 1), jnp.float32),
        ),
        compiler_params=pltpu.CompilerParams(
            dimension_semantics=("parallel", "arbitrary"),
            vmem_limit_bytes=vmem_limit,
        ),
        cost_estimate=_cost_estimate(n_pad, d_pad, gi, train=True),
    )(n_valid, x, w_p, b_p, tgt)

    loss = jnp.sum(loss_parts) / n
    # TODO(synk): a KD consumer could take the padded (n_pad, 128) bf16 slab
    # directly and skip this strided slice.
    logits = logits_pad[:n, :NUM_CLASSES]
    return logits, {"ce": loss}


def vanilla_forward_test(image, w, b, *, block_d=None):
    """Vanilla.forward_test: returns logits only."""
    n = image.shape[0]
    d = w.shape[0]
    tn, n_pad, td, d_pad, vmem_limit = _choose_tiles(n, d, max_td=block_d)
    gi, gk = n_pad // tn, d_pad // td

    x, w_p, b_p = _prepare_inputs(image, w, b, d_pad)
    if n_pad != n:
        x = jnp.pad(x, ((0, n_pad - n), (0, 0)))

    logits_pad = pl.pallas_call(
        _vanilla_test_kernel,
        grid=(gi, gk),
        in_specs=[
            pl.BlockSpec((tn, td), lambda i, k: (i, k)),
            pl.BlockSpec((td, K_PAD), lambda i, k: (k, 0)),
            pl.BlockSpec((1, K_PAD), lambda i, k: (0, 0)),
        ],
        out_specs=pl.BlockSpec((tn, K_PAD), lambda i, k: (i, 0)),
        out_shape=jax.ShapeDtypeStruct((n_pad, K_PAD), jnp.bfloat16),
        scratch_shapes=[pltpu.VMEM((tn, K_PAD), jnp.float32)],
        compiler_params=pltpu.CompilerParams(
            dimension_semantics=("parallel", "arbitrary"),
            vmem_limit_bytes=vmem_limit,
        ),
        cost_estimate=_cost_estimate(n_pad, d_pad, gi, train=False),
    )(x, w_p, b_p)

    return logits_pad[:n, :NUM_CLASSES]


def vanilla_forward(training, image, target, w, b):
    """Vanilla.forward: dispatch on self.training."""
    if training:
        return vanilla_forward_train(image, target, w, b)
    return vanilla_forward_test(image, w, b)


# Pure-JAX reference (f32) for correctness checking.
def _reference(image, target, w, b):
    n = image.shape[0]
    x = image.reshape(n, -1).astype(jnp.float32)
    logits = x @ w + b.reshape(1, -1)
    logp = jax.nn.log_softmax(logits, axis=-1)
    nll = -jnp.take_along_axis(logp, target.reshape(-1, 1).astype(jnp.int32), axis=-1)
    return logits, jnp.mean(nll)


if __name__ == "__main__":
    key = jax.random.PRNGKey(0)
    k_img, k_tgt, k_w = jax.random.split(key, 3)

    # Small shapes consistent with an image-classification student.
    N, C, H, W = 2, 4, 16, 16
    D = C * H * W

    image = jax.random.normal(k_img, (N, C, H, W), jnp.float32)
    target = jax.random.randint(k_tgt, (N,), 0, NUM_CLASSES, jnp.int32)

    # Deterministic synthetic student parameters (linear classifier).
    w = jax.random.normal(k_w, (D, NUM_CLASSES), jnp.float32) * 0.02
    b = jnp.zeros((NUM_CLASSES,), jnp.float32)

    # Training-mode forward: (logits, {'ce': loss}); eval-mode: logits only.
    logits_train, losses = vanilla_forward(True, image, target, w, b)
    logits_test = vanilla_forward(False, image, target, w, b)
    # Also exercise the D-reduction grid axis (forced 128-wide D tiles -> 8 steps).
    logits_tiled, losses_tiled = vanilla_forward_train(image, target, w, b, block_d=128)
    jax.block_until_ready((logits_train, losses["ce"], logits_test,
                           logits_tiled, losses_tiled["ce"]))

    ref_logits, ref_loss = _reference(image, target, w, b)

    assert logits_train.shape == (N, NUM_CLASSES)
    assert logits_test.shape == (N, NUM_CLASSES)
    lt = logits_train.astype(jnp.float32)
    le = logits_test.astype(jnp.float32)
    ld = logits_tiled.astype(jnp.float32)
    # Train/eval share the same bf16 accumulate path.
    assert bool(jnp.allclose(lt, le, atol=1e-3))
    # Match the f32 reference within bf16-input tolerance.
    assert bool(jnp.allclose(lt, ref_logits, atol=2e-2, rtol=5e-2))
    assert bool(jnp.allclose(ld, ref_logits, atol=2e-2, rtol=5e-2))
    assert bool(jnp.isfinite(losses["ce"]))
    assert bool(jnp.allclose(losses["ce"], ref_loss, atol=2e-2, rtol=5e-2))
    assert bool(jnp.allclose(losses_tiled["ce"], ref_loss, atol=2e-2, rtol=5e-2))

    print("KERNEL_OK")
</pallas_src>

<mosaic_0001>
module attributes {stable_mosaic.version = 11 : i64} {
  func.func @_vanilla_train_kernel(%arg0: i32, %arg1: i32, %arg2: memref<1xi32, #tpu.memory_space<smem>>, %arg3: memref<8x1024xbf16, #tpu.memory_space<vmem>>, %arg4: memref<1024x128xbf16, #tpu.memory_space<vmem>>, %arg5: memref<1x128xf32, #tpu.memory_space<vmem>>, %arg6: memref<8x1xi32, #tpu.memory_space<vmem>>, %arg7: memref<8x128xbf16, #tpu.memory_space<vmem>>, %arg8: memref<1x1xf32, #tpu.memory_space<smem>>, %arg9: memref<8x128xf32, #tpu.memory_space<vmem>>) attributes {dimension_semantics = [#tpu.dimension_semantics<parallel>, #tpu.dimension_semantics<arbitrary>], iteration_bounds = array<i64: 1, 1>, scalar_prefetch = 1 : i64, scratch_operands = 1 : i64, tpu.core_type = #tpu.core_type<tc>, window_params = [{transform_indices = @transform_0, window_bounds = array<i64: 8, 1024>}, {transform_indices = @transform_1, window_bounds = array<i64: 1024, 128>}, {pipeline_mode = #tpu.pipeline_mode<synchronous>, transform_indices = @transform_2, window_bounds = array<i64: 1, 128>}, {transform_indices = @transform_3, window_bounds = array<i64: 8, 1>}, {transform_indices = @transform_4, window_bounds = array<i64: 8, 128>}, {transform_indices = @transform_5, window_bounds = array<i64: 1, 1>}]} {
    %c0_i32 = arith.constant 0 : i32
    %0 = arith.cmpi eq, %arg1, %c0_i32 : i32
    %1 = arith.extui %0 : i1 to i32
    %c0_i32_0 = arith.constant 0 : i32
    %2 = arith.cmpi ne, %1, %c0_i32_0 : i32
    scf.if %2 {
      %cst_10 = arith.constant 0.000000e+00 : f32
      %12 = vector.broadcast %cst_10 : f32 to vector<8x128xf32>
      %c0_11 = arith.constant 0 : index
      %c0_12 = arith.constant 0 : index
      %13 = vector.load %arg5[%c0_11, %c0_12] : memref<1x128xf32, #tpu.memory_space<vmem>>, vector<1x128xf32>
      %14 = vector.broadcast %13 : vector<1x128xf32> to vector<8x128xf32>
      %15 = arith.addf %12, %14 : vector<8x128xf32>
      %c0_13 = arith.constant 0 : index
      %c0_14 = arith.constant 0 : index
      %16 = vector.load %arg9[%c0_13, %c0_14] : memref<8x128xf32, #tpu.memory_space<vmem>>, vector<8x128xf32>
      tpu.vector_store %arg9[%c0_13, %c0_14], %15 {strides = array<i32>} : memref<8x128xf32, #tpu.memory_space<vmem>>, vector<8x128xf32>,
    } else {
    }
    %c0 = arith.constant 0 : index
    %c0_1 = arith.constant 0 : index
    %3 = vector.load %arg9[%c0, %c0_1] : memref<8x128xf32, #tpu.memory_space<vmem>>, vector<8x128xf32>
    %c0_2 = arith.constant 0 : index
    %c0_3 = arith.constant 0 : index
    %4 = vector.load %arg3[%c0_2, %c0_3] : memref<8x1024xbf16, #tpu.memory_space<vmem>>, vector<8x1024xbf16>
    %c0_4 = arith.constant 0 : index
    %c0_5 = arith.constant 0 : index
    %5 = vector.load %arg4[%c0_4, %c0_5] : memref<1024x128xbf16, #tpu.memory_space<vmem>>, vector<1024x128xbf16>
    %cst = arith.constant dense<0.000000e+00> : vector<8x128xf32>
    %6 = tpu.matmul %4, %5, %cst {dimension_numbers = #tpu.dot_dimension_numbers<[1], [0], [0], [1], [0, 0, 1, 1], [], []>} : vector<8x1024xbf16>, vector<1024x128xbf16>, vector<8x128xf32> -> vector<8x128xf32>
    %7 = arith.addf %3, %6 : vector<8x128xf32>
    %c0_6 = arith.constant 0 : index
    %c0_7 = arith.constant 0 : index
    %8 = vector.load %arg9[%c0_6, %c0_7] : memref<8x128xf32, #tpu.memory_space<vmem>>, vector<8x128xf32>
    tpu.vector_store %arg9[%c0_6, %c0_7], %7 {strides = array<i32>} : memref<8x128xf32, #tpu.memory_space<vmem>>, vector<8x128xf32>,
    %c0_i32_8 = arith.constant 0 : i32
    %9 = arith.cmpi eq, %arg1, %c0_i32_8 : i32
    %10 = arith.extui %9 : i1 to i32
    %c0_i32_9 = arith.constant 0 : i32
    %11 = arith.cmpi ne, %10, %c0_i32_9 : i32
    scf.if %11 {
      %c0_10 = arith.constant 0 : index
      %c0_11 = arith.constant 0 : index
      %12 = vector.load %arg9[%c0_10, %c0_11] : memref<8x128xf32, #tpu.memory_space<vmem>>, vector<8x128xf32>
      %13 = arith.truncf %12 : vector<8x128xf32> to vector<8x128xbf16>
      %c0_12 = arith.constant 0 : index
      %c0_13 = arith.constant 0 : index
      %14 = vector.load %arg7[%c0_12, %c0_13] : memref<8x128xbf16, #tpu.memory_space<vmem>>, vector<8x128xbf16>
      tpu.vector_store %arg7[%c0_12, %c0_13], %13 {strides = array<i32>} : memref<8x128xbf16, #tpu.memory_space<vmem>>, vector<8x128xbf16>,
      %cst_14 = arith.constant dense<0xFF800000> : vector<8xf32>
      %15 = vector.multi_reduction <maximumf>, %12, %cst_14 [1] : vector<8x128xf32> to vector<8xf32>
      %16 = vector.shape_cast %15 : vector<8xf32> to vector<8x1xf32>
      %17 = vector.broadcast %16 : vector<8x1xf32> to vector<8x128xf32>
      %18 = arith.subf %12, %17 : vector<8x128xf32>
      %19 = math.exp %18 : vector<8x128xf32>
      %cst_15 = arith.constant dense<0.000000e+00> : vector<8xf32>
      %20 = vector.multi_reduction <add>, %19, %cst_15 [1] : vector<8x128xf32> to vector<8xf32>
      %21 = vector.shape_cast %20 : vector<8xf32> to vector<8x1xf32>
      %22 = math.log %21 : vector<8x1xf32>
      %23 = tpu.iota {dimensions = array<i32: 1>} : vector<8x128xi32>
      %c0_16 = arith.constant 0 : index
      %c0_17 = arith.constant 0 : index
      %24 = vector.load %arg6[%c0_16, %c0_17] : memref<8x1xi32, #tpu.memory_space<vmem>>, vector<8x1xi32>
      %25 = vector.broadcast %24 : vector<8x1xi32> to vector<8x128xi32>
      %26 = arith.cmpi eq, %23, %25 : vector<8x128xi32>
      %cst_18 = arith.constant 0.000000e+00 : f32
      %27 = vector.broadcast %cst_18 : f32 to vector<8x128xf32>
      %28 = arith.select %26, %18, %27 : vector<8x128xi1>, vector<8x128xf32>
      %cst_19 = arith.constant dense<0.000000e+00> : vector<8xf32>
      %29 = vector.multi_reduction <add>, %28, %cst_19 [1] : vector<8x128xf32> to vector<8xf32>
      %30 = vector.shape_cast %29 : vector<8xf32> to vector<8x1xf32>
      %31 = arith.subf %22, %30 : vector<8x1xf32>
      %c8_i32 = arith.constant 8 : i32
      %32 = arith.muli %arg0, %c8_i32 : i32
      %33 = tpu.iota {dimensions = array<i32: 0>} : vector<8x1xi32>
      %34 = vector.broadcast %32 : i32 to vector<8x1xi32>
      %35 = arith.addi %34, %33 : vector<8x1xi32>
      %c0_20 = arith.constant 0 : index
      %36 = memref.load %arg2[%c0_20] : memref<1xi32, #tpu.memory_space<smem>>
      %37 = vector.broadcast %36 : i32 to vector<8x1xi32>
      %38 = arith.cmpi slt, %35, %37 : vector<8x1xi32>
      %39 = arith.extui %38 : vector<8x1xi1> to vector<8x1xi32>
      %40 = arith.sitofp %39 : vector<8x1xi32> to vector<8x1xf32>
      %41 = arith.mulf %31, %40 : vector<8x1xf32>
      %42 = vector.shape_cast %41 : vector<8x1xf32> to vector<1x8x1xf32>
      %cst_21 = arith.constant dense<0.000000e+00> : vector<1xf32>
      %43 = vector.multi_reduction <add>, %42, %cst_21 [1, 2] : vector<1x8x1xf32> to vector<1xf32>
      %44 = vector.shape_cast %43 : vector<1xf32> to vector<1x1x1xf32>
      %45 = vector.extract %44[0, 0, 0] : f32 from vector<1x1x1xf32>
      %c0_22 = arith.constant 0 : index
      %c0_23 = arith.constant 0 : index
      %46 = memref.load %arg8[%c0_22, %c0_23] : memref<1x1xf32, #tpu.memory_space<smem>>
      memref.store %45, %arg8[%c0_22, %c0_23] : memref<1x1xf32, #tpu.memory_space<smem>>
    } else {
    }
    return
  }
  func.func @transform_0(%arg0: i32, %arg1: i32, %arg2: memref<1xi32, #tpu.memory_space<smem>>) -> (i32, i32) {
    %c0_i32 = arith.constant 0 : i32
    return %arg0, %arg1 : i32, i32
  }
  func.func @transform_1(%arg0: i32, %arg1: i32, %arg2: memref<1xi32, #tpu.memory_space<smem>>) -> (i32, i32) {
    %c0_i32 = arith.constant 0 : i32
    %c0_i32_0 = arith.constant 0 : i32
    return %arg1, %c0_i32 : i32, i32
  }
  func.func @transform_2(%arg0: i32, %arg1: i32, %arg2: memref<1xi32, #tpu.memory_space<smem>>) -> (i32, i32) {
    %c0_i32 = arith.constant 0 : i32
    %c0_i32_0 = arith.constant 0 : i32
    %c0_i32_1 = arith.constant 0 : i32
    return %c0_i32, %c0_i32_0 : i32, i32
  }
  func.func @transform_3(%arg0: i32, %arg1: i32, %arg2: memref<1xi32, #tpu.memory_space<smem>>) -> (i32, i32) {
    %c0_i32 = arith.constant 0 : i32
    %c0_i32_0 = arith.constant 0 : i32
    return %arg0, %c0_i32 : i32, i32
  }
  func.func @transform_4(%arg0: i32, %arg1: i32, %arg2: memref<1xi32, #tpu.memory_space<smem>>) -> (i32, i32) {
    %c0_i32 = arith.constant 0 : i32
    %c0_i32_0 = arith.constant 0 : i32
    return %arg0, %c0_i32 : i32, i32
  }
  func.func @transform_5(%arg0: i32, %arg1: i32, %arg2: memref<1xi32, #tpu.memory_space<smem>>) -> (i32, i32) {
    %c0_i32 = arith.constant 0 : i32
    %c0_i32_0 = arith.constant 0 : i32
    return %arg0, %c0_i32 : i32, i32
  }
}

</mosaic_0001>

<llo_original>
// kernel: tpu_custom_call.1
$region0: #{tpu_custom_call.1}
  #allocation0 [shape = 'u32[]', space=smem, size = 0x4, offset = 0x4, fixed_abs, tag = 'smem constant byte address 0x4 - core index']
  #allocation1 [shape = 'u32[144,128]{1,0:T(1,128)}', space=vmem, size = 0x12000, scoped, tag = 'internal scratch']
  #allocation2 [shape = 'f32[8,128]{1,0:T(8,128)}', space=vmem, size = 0x1000, scoped, tag = 'scratch operand']
  #allocation3 [shape = 's32[1]{0}', space=sflag, size = 0x4, scoped, tag = 'scoped memory for tpu_custom_call.1']
  #allocation4 [shape = 's32[1]{0:T(128)S(6)}', space=smem, size = 0x200, scoped, tag = 'prefetched SMEM operand 0']
  %s0 = inlined_call_operand.<no memory space> [shape: s32[1], index: 0, kind: input, shape index: {}]
  %s1 = inlined_call_operand.hbm [shape: bf16[8,1024], index: 1, kind: input, shape index: {}]
  %s2 = inlined_call_operand.hbm [shape: bf16[1024,128], index: 2, kind: input, shape index: {}]
  %s3 = inlined_call_operand.vmem [shape: f32[1,128], index: 3, kind: input, shape index: {}]
  %s4 = inlined_call_operand.vmem [shape: s32[8,1], index: 4, kind: input, shape index: {}]
  %s5 = inlined_call_operand.hbm [shape: bf16[8,128], index: 5, kind: output, shape index: {0}]
  %s6 = inlined_call_operand.hbm [shape: f32[1,1], index: 6, kind: output, shape index: {1}]
  %7 = xla_tuple %s5, %s6
  %s8 = sld [smem:[#allocation0]]
  $region50: #{tpu_custom_call.1} parent=0
    _
  %s10 = ssub.s32 1, %s8
  %s11 = scalar_select 0, %s10, %s8
  %12 = sst [smem:[#allocation4]] %s0
  $region1: #{tpu_custom_call.1} parent=0
    #allocation5 [shape = 'u8[16384]{0}', space=vmem, size = 0x4000, scoped, tag = 'input window, operand 1, single buffered']
    #allocation6 [shape = 's32[1]{0}', space=sflag, size = 0x4, scoped, tag = 'scoped memory for tpu_custom_call.1']
    #allocation7 [shape = 's32[1]{0}', space=sflag, size = 0x4, scoped, tag = 'scoped memory for tpu_custom_call.1']
    #allocation8 [shape = 's32[1]{0}', space=sflag, size = 0x4, scoped, tag = 'scoped memory for tpu_custom_call.1']
    #allocation9 [shape = 'u8[262144]{0}', space=vmem, size = 0x40000, scoped, tag = 'input window, operand 2, single buffered']
    #allocation10 [shape = 's32[1]{0}', space=sflag, size = 0x4, scoped, tag = 'scoped memory for tpu_custom_call.1']
    #allocation11 [shape = 'u8[2048]{0}', space=vmem, size = 0x800, scoped, tag = 'output window, operand 0, single buffered']
    #allocation12 [shape = 'u8[512]{0}', space=smem, size = 0x200, scoped, tag = 'output window, operand 1, single buffered']
    %13 = vsyncpa [#allocation6], 0
    %14 = vsyncpa [#allocation10], 0
    %15 = vsyncpa [#allocation7], 0
    %16 = vsyncpa [#allocation8], 0
    // Predicated region
    $region2: #{tpu_custom_call.1} parent=1 // pred_check
      _
    $region3: #{tpu_custom_call.1} parent=1 // pred_check_branch
      %18 = sbr.rel (0) target = $region5
    $region4: #{tpu_custom_call.1} parent=1 // pred_region
      %s20 = ssub.s32 512, 512
      %21 = vsyncadd [#allocation6], %s20
      %s23 = sshll.u32 [#allocation5], 4
      %s24 = int_to_ptr.vmem [resolvable:$true] %s23
      %26 = dma.hbm_to_vmem [thread:$0]  %s1, 512, %s24, [#allocation6]
    $region5: #{tpu_custom_call.1} parent=1 // pred_fallthru
      _
    // Predicated region
    $region6: #{tpu_custom_call.1} parent=1 // pred_check
      _
    $region7: #{tpu_custom_call.1} parent=1 // pred_check_branch
      %28 = sbr.rel (0) target = $region9
    $region8: #{tpu_custom_call.1} parent=1 // pred_region
      %s30 = ssub.s32 8192, 8192
      %31 = vsyncadd [#allocation10], %s30
      %s32 = sshll.u32 [#allocation9], 4
      %s33 = int_to_ptr.vmem [resolvable:$true] %s32
      %38 = dma.hbm_to_vmem [thread:$0]  %s2, 8192, %s33, [#allocation10], 64, 64, 4
    $region9: #{tpu_custom_call.1} parent=1 // pred_fallthru
      _
    // Predicated region
    $region10: #{tpu_custom_call.1} parent=1 // pred_check
      _
    $region11: #{tpu_custom_call.1} parent=1 // pred_check_branch
      %40 = sbr.rel (0) target = $region13
    $region12: #{tpu_custom_call.1} parent=1 // pred_region
      _
    $region13: #{tpu_custom_call.1} parent=1 // pred_fallthru
      _
    // Predicated region
    $region14: #{tpu_custom_call.1} parent=1 // pred_check
      _
    $region15: #{tpu_custom_call.1} parent=1 // pred_check_branch
      %42 = sbr.rel (0) target = $region17
    $region16: #{tpu_custom_call.1} parent=1 // pred_region
      _
    $region17: #{tpu_custom_call.1} parent=1 // pred_fallthru
      _
    // Predicated region
    $region18: #{tpu_custom_call.1} parent=1 // pred_check
      _
    $region19: #{tpu_custom_call.1} parent=1 // pred_check_branch
      %44 = sbr.rel (0) target = $region21
    $region20: #{tpu_custom_call.1} parent=1 // pred_region
      %45 = dma.done [#allocation6], 512
    $region21: #{tpu_custom_call.1} parent=1 // pred_fallthru
      _
    // Predicated region
    $region22: #{tpu_custom_call.1} parent=1 // pred_check
      _
    $region23: #{tpu_custom_call.1} parent=1 // pred_check_branch
      %47 = sbr.rel (0) target = $region25
    $region24: #{tpu_custom_call.1} parent=1 // pred_region
      %48 = dma.done [#allocation10], 8192
    $region25: #{tpu_custom_call.1} parent=1 // pred_fallthru
      _
    %p50 = scmp.eq.s32.totalorder 0, 0
    // Predicated region
    $region26: #{tpu_custom_call.1} parent=1 // pred_check
      %p51 = pneg %p50
    $region27: #{tpu_custom_call.1} parent=1 // pred_check_branch
      %53 = sbr.rel (%p51) target = $region29
    $region28: #{tpu_custom_call.1} parent=1 // pred_region
      %v54 = vld [vmem:[%s3] sm:$0x1]
      %v56 = vlaneseq
      %v57 = vshrl.u32 %v56, 7
      %v58 = vsub.s32 0, %v57
      %v59 = vrot.slane %v54, %v58
      %v61 = vadd.f32 %v59, 0.0
      %62 = vst [vmem:[#allocation2] sm:$0xff] %v61
    $region29: #{tpu_custom_call.1} parent=1 // pred_fallthru
      _
    %v63 = vld [vmem:[#allocation2] sm:$0xff]
    %v64 = vld [vmem:[#allocation5] sm:$0xff]
    %v65 = vld [vmem:[#allocation5 + $0x8] sm:$0xff]
    %v66 = vld [vmem:[#allocation5 + $0x10] sm:$0xff]
    %v67 = vld [vmem:[#allocation5 + $0x18] sm:$0xff]
    %v68 = vld [vmem:[#allocation9] sm:$0xf]
    %v69 = vld [vmem:[#allocation9 + $0x4] sm:$0xf]
    %v70 = vld [vmem:[#allocation9 + $0x8] sm:$0xf]
    %v71 = vld [vmem:[#allocation9 + $0xc] sm:$0xf]
    %v72 = vld [vmem:[#allocation9 + $0x10] sm:$0xf]
    %v73 = vld [vmem:[#allocation9 + $0x14] sm:$0xf]
    %v74 = vld [vmem:[#allocation9 + $0x18] sm:$0xf]
    %v75 = vld [vmem:[#allocation9 + $0x1c] sm:$0xf]
    %v76 = vld [vmem:[#allocation9 + $0x20] sm:$0xf]
    %v77 = vld [vmem:[#allocation9 + $0x24] sm:$0xf]
    %v78 = vld [vmem:[#allocation9 + $0x28] sm:$0xf]
    %v79 = vld [vmem:[#allocation9 + $0x2c] sm:$0xf]
    %v80 = vld [vmem:[#allocation9 + $0x30] sm:$0xf]
    %v81 = vld [vmem:[#allocation9 + $0x34] sm:$0xf]
    %v82 = vld [vmem:[#allocation9 + $0x38] sm:$0xf]
    %v83 = vld [vmem:[#allocation9 + $0x3c] sm:$0xf]
    %v84 = vld [vmem:[#allocation9 + $0x40] sm:$0xf]
    %v85 = vld [vmem:[#allocation9 + $0x44] sm:$0xf]
    %v86 = vld [vmem:[#allocation9 + $0x48] sm:$0xf]
    %v87 = vld [vmem:[#allocation9 + $0x4c] sm:$0xf]
    %v88 = vld [vmem:[#allocation9 + $0x50] sm:$0xf]
    %v89 = vld [vmem:[#allocation9 + $0x54] sm:$0xf]
    %v90 = vld [vmem:[#allocation9 + $0x58] sm:$0xf]
    %v91 = vld [vmem:[#allocation9 + $0x5c] sm:$0xf]
    %v92 = vld [vmem:[#allocation9 + $0x60] sm:$0xf]
    %v93 = vld [vmem:[#allocation9 + $0x64] sm:$0xf]
    %v94 = vld [vmem:[#allocation9 + $0x68] sm:$0xf]
    %v95 = vld [vmem:[#allocation9 + $0x6c] sm:$0xf]
    %v96 = vld [vmem:[#allocation9 + $0x70] sm:$0xf]
    %v97 = vld [vmem:[#allocation9 + $0x74] sm:$0xf]
    %v98 = vld [vmem:[#allocation9 + $0x78] sm:$0xf]
    %v99 = vld [vmem:[#allocation9 + $0x7c] sm:$0xf]
    %v100 = vld [vmem:[#allocation9 + $0x80] sm:$0xf]
    %v101 = vld [vmem:[#allocation9 + $0x84] sm:$0xf]
    %v102 = vld [vmem:[#allocation9 + $0x88] sm:$0xf]
    %v103 = vld [vmem:[#allocation9 + $0x8c] sm:$0xf]
    %v104 = vld [vmem:[#allocation9 + $0x90] sm:$0xf]
    %v105 = vld [vmem:[#allocation9 + $0x94] sm:$0xf]
    %v106 = vld [vmem:[#allocation9 + $0x98] sm:$0xf]
    %v107 = vld [vmem:[#allocation9 + $0x9c] sm:$0xf]
    %v108 = vld [vmem:[#allocation9 + $0xa0] sm:$0xf]
    %v109 = vld [vmem:[#allocation9 + $0xa4] sm:$0xf]
    %v110 = vld [vmem:[#allocation9 + $0xa8] sm:$0xf]
    %v111 = vld [vmem:[#allocation9 + $0xac] sm:$0xf]
    %v112 = vld [vmem:[#allocation9 + $0xb0] sm:$0xf]
    %v113 = vld [vmem:[#allocation9 + $0xb4] sm:$0xf]
    %v114 = vld [vmem:[#allocation9 + $0xb8] sm:$0xf]
    %v115 = vld [vmem:[#allocation9 + $0xbc] sm:$0xf]
    %v116 = vld [vmem:[#allocation9 + $0xc0] sm:$0xf]
    %v117 = vld [vmem:[#allocation9 + $0xc4] sm:$0xf]
    %v118 = vld [vmem:[#allocation9 + $0xc8] sm:$0xf]
    %v119 = vld [vmem:[#allocation9 + $0xcc] sm:$0xf]
    %v120 = vld [vmem:[#allocation9 + $0xd0] sm:$0xf]
    %v121 = vld [vmem:[#allocation9 + $0xd4] sm:$0xf]
    %v122 = vld [vmem:[#allocation9 + $0xd8] sm:$0xf]
    %v123 = vld [vmem:[#allocation9 + $0xdc] sm:$0xf]
    %v124 = vld [vmem:[#allocation9 + $0xe0] sm:$0xf]
    %v125 = vld [vmem:[#allocation9 + $0xe4] sm:$0xf]
    %v126 = vld [vmem:[#allocation9 + $0xe8] sm:$0xf]
    %v127 = vld [vmem:[#allocation9 + $0xec] sm:$0xf]
    %v128 = vld [vmem:[#allocation9 + $0xf0] sm:$0xf]
    %v129 = vld [vmem:[#allocation9 + $0xf4] sm:$0xf]
    %v130 = vld [vmem:[#allocation9 + $0xf8] sm:$0xf]
    %v131 = vld [vmem:[#allocation9 + $0xfc] sm:$0xf]
    %v132 = vld [vmem:[#allocation9 + $0x100] sm:$0xf]
    %v133 = vld [vmem:[#allocation9 + $0x104] sm:$0xf]
    %v134 = vld [vmem:[#allocation9 + $0x108] sm:$0xf]
    %v135 = vld [vmem:[#allocation9 + $0x10c] sm:$0xf]
    %v136 = vld [vmem:[#allocation9 + $0x110] sm:$0xf]
    %v137 = vld [vmem:[#allocation9 + $0x114] sm:$0xf]
    %v138 = vld [vmem:[#allocation9 + $0x118] sm:$0xf]
    %v139 = vld [vmem:[#allocation9 + $0x11c] sm:$0xf]
    %v140 = vld [vmem:[#allocation9 + $0x120] sm:$0xf]
    %v141 = vld [vmem:[#allocation9 + $0x124] sm:$0xf]
    %v142 = vld [vmem:[#allocation9 + $0x128] sm:$0xf]
    %v143 = vld [vmem:[#allocation9 + $0x12c] sm:$0xf]
    %v144 = vld [vmem:[#allocation9 + $0x130] sm:$0xf]
    %v145 = vld [vmem:[#allocation9 + $0x134] sm:$0xf]
    %v146 = vld [vmem:[#allocation9 + $0x138] sm:$0xf]
    %v147 = vld [vmem:[#allocation9 + $0x13c] sm:$0xf]
    %v148 = vld [vmem:[#allocation9 + $0x140] sm:$0xf]
    %v149 = vld [vmem:[#allocation9 + $0x144] sm:$0xf]
    %v150 = vld [vmem:[#allocation9 + $0x148] sm:$0xf]
    %v151 = vld [vmem:[#allocation9 + $0x14c] sm:$0xf]
    %v152 = vld [vmem:[#allocation9 + $0x150] sm:$0xf]
    %v153 = vld [vmem:[#allocation9 + $0x154] sm:$0xf]
    %v154 = vld [vmem:[#allocation9 + $0x158] sm:$0xf]
    %v155 = vld [vmem:[#allocation9 + $0x15c] sm:$0xf]
    %v156 = vld [vmem:[#allocation9 + $0x160] sm:$0xf]
    %v157 = vld [vmem:[#allocation9 + $0x164] sm:$0xf]
    %v158 = vld [vmem:[#allocation9 + $0x168] sm:$0xf]
    %v159 = vld [vmem:[#allocation9 + $0x16c] sm:$0xf]
    %v160 = vld [vmem:[#allocation9 + $0x170] sm:$0xf]
    %v161 = vld [vmem:[#allocation9 + $0x174] sm:$0xf]
    %v162 = vld [vmem:[#allocation9 + $0x178] sm:$0xf]
    %v163 = vld [vmem:[#allocation9 + $0x17c] sm:$0xf]
    %v164 = vld [vmem:[#allocation9 + $0x180] sm:$0xf]
    %v165 = vld [vmem:[#allocation9 + $0x184] sm:$0xf]
    %v166 = vld [vmem:[#allocation9 + $0x188] sm:$0xf]
    %v167 = vld [vmem:[#allocation9 + $0x18c] sm:$0xf]
    %v168 = vld [vmem:[#allocation9 + $0x190] sm:$0xf]
    %v169 = vld [vmem:[#allocation9 + $0x194] sm:$0xf]
    %v170 = vld [vmem:[#allocation9 + $0x198] sm:$0xf]
    %v171 = vld [vmem:[#allocation9 + $0x19c] sm:$0xf]
    %v172 = vld [vmem:[#allocation9 + $0x1a0] sm:$0xf]
    %v173 = vld [vmem:[#allocation9 + $0x1a4] sm:$0xf]
    %v174 = vld [vmem:[#allocation9 + $0x1a8] sm:$0xf]
    %v175 = vld [vmem:[#allocation9 + $0x1ac] sm:$0xf]
    %v176 = vld [vmem:[#allocation9 + $0x1b0] sm:$0xf]
    %v177 = vld [vmem:[#allocation9 + $0x1b4] sm:$0xf]
    %v178 = vld [vmem:[#allocation9 + $0x1b8] sm:$0xf]
    %v179 = vld [vmem:[#allocation9 + $0x1bc] sm:$0xf]
    %v180 = vld [vmem:[#allocation9 + $0x1c0] sm:$0xf]
    %v181 = vld [vmem:[#allocation9 + $0x1c4] sm:$0xf]
    %v182 = vld [vmem:[#allocation9 + $0x1c8] sm:$0xf]
    %v183 = vld [vmem:[#allocation9 + $0x1cc] sm:$0xf]
    %v184 = vld [vmem:[#allocation9 + $0x1d0] sm:$0xf]
    %v185 = vld [vmem:[#allocation9 + $0x1d4] sm:$0xf]
    %v186 = vld [vmem:[#allocation9 + $0x1d8] sm:$0xf]
    %v187 = vld [vmem:[#allocation9 + $0x1dc] sm:$0xf]
    %v188 = vld [vmem:[#allocation9 + $0x1e0] sm:$0xf]
    %v189 = vld [vmem:[#allocation9 + $0x1e4] sm:$0xf]
    %v190 = vld [vmem:[#allocation9 + $0x1e8] sm:$0xf]
    %v191 = vld [vmem:[#allocation9 + $0x1ec] sm:$0xf]
    %v192 = vld [vmem:[#allocation9 + $0x1f0] sm:$0xf]
    %v193 = vld [vmem:[#allocation9 + $0x1f4] sm:$0xf]
    %v194 = vld [vmem:[#allocation9 + $0x1f8] sm:$0xf]
    %v195 = vld [vmem:[#allocation9 + $0x1fc] sm:$0xf]
    %v200 = vunpack.c.l.b16 %v64
    %v201 = vunpack.c.h.b16 %v64
    %v202 = vunpack.c.l.b16 %v65
    %v203 = vunpack.c.h.b16 %v65
    %v204 = vunpack.c.l.b16 %v66
    %v205 = vunpack.c.h.b16 %v66
    %v206 = vunpack.c.l.b16 %v67
    %v207 = vunpack.c.h.b16 %v67
    %v208 = vpack.c.b16 %v200, %v200
    %v209 = vpack.c.b16 %v201, %v201
    %v210 = vpack.c.b16 %v202, %v202
    %v211 = vpack.c.b16 %v203, %v203
    %v212 = vpack.c.b16 %v204, %v204
    %v213 = vpack.c.b16 %v205, %v205
    %v214 = vpack.c.b16 %v206, %v206
    %v215 = vpack.c.b16 %v207, %v207
    %v352 = vunpack.c.l.b16 %v68
    %v353 = vunpack.c.l.b16 %v69
    %v354 = vunpack.c.l.b16 %v70
    %v355 = vunpack.c.l.b16 %v71
    %v356 = vunpack.c.l.b16 %v72
    %v357 = vunpack.c.l.b16 %v73
    %v358 = vunpack.c.l.b16 %v74
    %v359 = vunpack.c.l.b16 %v75
    %v360 = vunpack.c.l.b16 %v76
    %v361 = vunpack.c.l.b16 %v77
    %v362 = vunpack.c.l.b16 %v78
    %v363 = vunpack.c.l.b16 %v79
    %v364 = vunpack.c.l.b16 %v80
    %v365 = vunpack.c.l.b16 %v81
    %v366 = vunpack.c.l.b16 %v82
    %v367 = vunpack.c.l.b16 %v83
    %v368 = vunpack.c.l.b16 %v84
    %v369 = vunpack.c.l.b16 %v85
    %v370 = vunpack.c.l.b16 %v86
    %v371 = vunpack.c.l.b16 %v87
    %v372 = vunpack.c.l.b16 %v88
    %v373 = vunpack.c.l.b16 %v89
    %v374 = vunpack.c.l.b16 %v90
    %v375 = vunpack.c.l.b16 %v91
    %v376 = vunpack.c.l.b16 %v92
    %v377 = vunpack.c.l.b16 %v93
    %v378 = vunpack.c.l.b16 %v94
    %v379 = vunpack.c.l.b16 %v95
    %v380 = vunpack.c.l.b16 %v96
    %v381 = vunpack.c.l.b16 %v97
    %v382 = vunpack.c.l.b16 %v98
    %v383 = vunpack.c.l.b16 %v99
    %v384 = vunpack.c.l.b16 %v100
    %v385 = vunpack.c.l.b16 %v101
    %v386 = vunpack.c.l.b16 %v102
    %v387 = vunpack.c.l.b16 %v103
    %v388 = vunpack.c.l.b16 %v104
    %v389 = vunpack.c.l.b16 %v105
    %v390 = vunpack.c.l.b16 %v106
    %v391 = vunpack.c.l.b16 %v107
    %v392 = vunpack.c.l.b16 %v108
    %v393 = vunpack.c.l.b16 %v109
    %v394 = vunpack.c.l.b16 %v110
    %v395 = vunpack.c.l.b16 %v111
    %v396 = vunpack.c.l.b16 %v112
    %v397 = vunpack.c.l.b16 %v113
    %v398 = vunpack.c.l.b16 %v114
    %v399 = vunpack.c.l.b16 %v115
    %v400 = vunpack.c.l.b16 %v116
    %v401 = vunpack.c.l.b16 %v117
    %v402 = vunpack.c.l.b16 %v118
    %v403 = vunpack.c.l.b16 %v119
    %v404 = vunpack.c.l.b16 %v120
    %v405 = vunpack.c.l.b16 %v121
    %v406 = vunpack.c.l.b16 %v122
    %v407 = vunpack.c.l.b16 %v123
    %v408 = vunpack.c.l.b16 %v124
    %v409 = vunpack.c.l.b16 %v125
    %v410 = vunpack.c.l.b16 %v126
    %v411 = vunpack.c.l.b16 %v127
    %v412 = vunpack.c.l.b16 %v128
    %v413 = vunpack.c.l.b16 %v129
    %v414 = vunpack.c.l.b16 %v130
    %v415 = vunpack.c.l.b16 %v131
    %v416 = vunpack.c.l.b16 %v132
    %v417 = vunpack.c.l.b16 %v133
    %v418 = vunpack.c.l.b16 %v134
    %v419 = vunpack.c.l.b16 %v135
    %v420 = vunpack.c.l.b16 %v136
    %v421 = vunpack.c.l.b16 %v137
    %v422 = vunpack.c.l.b16 %v138
    %v423 = vunpack.c.l.b16 %v139
    %v424 = vunpack.c.l.b16 %v140
    %v425 = vunpack.c.l.b16 %v141
    %v426 = vunpack.c.l.b16 %v142
    %v427 = vunpack.c.l.b16 %v143
    %v428 = vunpack.c.l.b16 %v144
    %v429 = vunpack.c.l.b16 %v145
    %v430 = vunpack.c.l.b16 %v146
    %v431 = vunpack.c.l.b16 %v147
    %v432 = vunpack.c.l.b16 %v148
    %v433 = vunpack.c.l.b16 %v149
    %v434 = vunpack.c.l.b16 %v150
    %v435 = vunpack.c.l.b16 %v151
    %v436 = vunpack.c.l.b16 %v152
    %v437 = vunpack.c.l.b16 %v153
    %v438 = vunpack.c.l.b16 %v154
    %v439 = vunpack.c.l.b16 %v155
    %v440 = vunpack.c.l.b16 %v156
    %v441 = vunpack.c.l.b16 %v157
    %v442 = vunpack.c.l.b16 %v158
    %v443 = vunpack.c.l.b16 %v159
    %v444 = vunpack.c.l.b16 %v160
    %v445 = vunpack.c.l.b16 %v161
    %v446 = vunpack.c.l.b16 %v162
    %v447 = vunpack.c.l.b16 %v163
    %v448 = vunpack.c.l.b16 %v164
    %v449 = vunpack.c.l.b16 %v165
    %v450 = vunpack.c.l.b16 %v166
    %v451 = vunpack.c.l.b16 %v167
    %v452 = vunpack.c.l.b16 %v168
    %v453 = vunpack.c.l.b16 %v169
    %v454 = vunpack.c.l.b16 %v170
    %v455 = vunpack.c.l.b16 %v171
    %v456 = vunpack.c.l.b16 %v172
    %v457 = vunpack.c.l.b16 %v173
    %v458 = vunpack.c.l.b16 %v174
    %v459 = vunpack.c.l.b16 %v175
    %v460 = vunpack.c.l.b16 %v176
    %v461 = vunpack.c.l.b16 %v177
    %v462 = vunpack.c.l.b16 %v178
    %v463 = vunpack.c.l.b16 %v179
    %v464 = vunpack.c.l.b16 %v180
    %v465 = vunpack.c.l.b16 %v181
    %v466 = vunpack.c.l.b16 %v182
    %v467 = vunpack.c.l.b16 %v183
    %v468 = vunpack.c.l.b16 %v184
    %v469 = vunpack.c.l.b16 %v185
    %v470 = vunpack.c.l.b16 %v186
    %v471 = vunpack.c.l.b16 %v187
    %v472 = vunpack.c.l.b16 %v188
    %v473 = vunpack.c.l.b16 %v189
    %v474 = vunpack.c.l.b16 %v190
    %v475 = vunpack.c.l.b16 %v191
    %v476 = vunpack.c.l.b16 %v192
    %v477 = vunpack.c.l.b16 %v193
    %v478 = vunpack.c.l.b16 %v194
    %v479 = vunpack.c.l.b16 %v195
    %v480 = vpack.c.b16 %v353, %v352
    %v481 = vpack.c.b16 %v355, %v354
    %v482 = vpack.c.b16 %v357, %v356
    %v483 = vpack.c.b16 %v359, %v358
    %v484 = vpack.c.b16 %v361, %v360
    %v485 = vpack.c.b16 %v363, %v362
    %v486 = vpack.c.b16 %v365, %v364
    %v487 = vpack.c.b16 %v367, %v366
    %v488 = vpack.c.b16 %v369, %v368
    %v489 = vpack.c.b16 %v371, %v370
    %v490 = vpack.c.b16 %v373, %v372
    %v491 = vpack.c.b16 %v375, %v374
    %v492 = vpack.c.b16 %v377, %v376
    %v493 = vpack.c.b16 %v379, %v378
    %v494 = vpack.c.b16 %v381, %v380
    %v495 = vpack.c.b16 %v383, %v382
    %v496 = vpack.c.b16 %v385, %v384
    %v497 = vpack.c.b16 %v387, %v386
    %v498 = vpack.c.b16 %v389, %v388
    %v499 = vpack.c.b16 %v391, %v390
    %v500 = vpack.c.b16 %v393, %v392
    %v501 = vpack.c.b16 %v395, %v394
    %v502 = vpack.c.b16 %v397, %v396
    %v503 = vpack.c.b16 %v399, %v398
    %v504 = vpack.c.b16 %v401, %v400
    %v505 = vpack.c.b16 %v403, %v402
    %v506 = vpack.c.b16 %v405, %v404
    %v507 = vpack.c.b16 %v407, %v406
    %v508 = vpack.c.b16 %v409, %v408
    %v509 = vpack.c.b16 %v411, %v410
    %v510 = vpack.c.b16 %v413, %v412
    %v511 = vpack.c.b16 %v415, %v414
    %v512 = vpack.c.b16 %v417, %v416
    %v513 = vpack.c.b16 %v419, %v418
    %v514 = vpack.c.b16 %v421, %v420
    %v515 = vpack.c.b16 %v423, %v422
    %v516 = vpack.c.b16 %v425, %v424
    %v517 = vpack.c.b16 %v427, %v426
    %v518 = vpack.c.b16 %v429, %v428
    %v519 = vpack.c.b16 %v431, %v430
    %v520 = vpack.c.b16 %v433, %v432
    %v521 = vpack.c.b16 %v435, %v434
    %v522 = vpack.c.b16 %v437, %v436
    %v523 = vpack.c.b16 %v439, %v438
    %v524 = vpack.c.b16 %v441, %v440
    %v525 = vpack.c.b16 %v443, %v442
    %v526 = vpack.c.b16 %v445, %v444
    %v527 = vpack.c.b16 %v447, %v446
    %v528 = vpack.c.b16 %v449, %v448
    %v529 = vpack.c.b16 %v451, %v450
    %v530 = vpack.c.b16 %v453, %v452
    %v531 = vpack.c.b16 %v455, %v454
    %v532 = vpack.c.b16 %v457, %v456
    %v533 = vpack.c.b16 %v459, %v458
    %v534 = vpack.c.b16 %v461, %v460
    %v535 = vpack.c.b16 %v463, %v462
    %v536 = vpack.c.b16 %v465, %v464
    %v537 = vpack.c.b16 %v467, %v466
    %v538 = vpack.c.b16 %v469, %v468
    %v539 = vpack.c.b16 %v471, %v470
    %v540 = vpack.c.b16 %v473, %v472
    %v541 = vpack.c.b16 %v475, %v474
    %v542 = vpack.c.b16 %v477, %v476
    %v543 = vpack.c.b16 %v479, %v478
    %608 = vmatprep.subr.bf16.mxu0 0
    %609 = vmatpush1.bf16.msra.mxu0 %v487
    %610 = vmatprep.subr.bf16.mxu0 0
    %611 = vmatpush1.bf16.msra.mxu0 %v486
    %612 = vmatprep.subr.bf16.mxu0 0
    %613 = vmatpush1.bf16.msra.mxu0 %v485
    %614 = vmatprep.subr.bf16.mxu0 0
    %615 = vmatpush1.bf16.msra.mxu0 %v484
    %616 = vmatprep.subr.bf16.mxu0 0
    %617 = vmatpush1.bf16.msra.mxu0 %v483
    %618 = vmatprep.subr.bf16.mxu0 0
    %619 = vmatpush1.bf16.msra.mxu0 %v482
    %620 = vmatprep.subr.bf16.mxu0 0
    %621 = vmatpush1.bf16.msra.mxu0 %v481
    %622 = vmatprep.subr.bf16.mxu0 0
    %623 = vmatpush1.bf16.msra.mxu0 %v480
    %624 = vmatprep.subr.bf16.mxu0 0
    %625 = vmatpush2.bf16.msra.mxu0 %v495
    %626 = vmatprep.subr.bf16.mxu0 0
    %627 = vmatpush2.bf16.msra.mxu0 %v494
    %628 = vmatprep.subr.bf16.mxu0 0
    %629 = vmatpush2.bf16.msra.mxu0 %v493
    %630 = vmatprep.subr.bf16.mxu0 0
    %631 = vmatpush2.bf16.msra.mxu0 %v492
    %632 = vmatprep.subr.bf16.mxu0 0
    %633 = vmatpush2.bf16.msra.mxu0 %v491
    %634 = vmatprep.subr.bf16.mxu0 0
    %635 = vmatpush2.bf16.msra.mxu0 %v490
    %636 = vmatprep.subr.bf16.mxu0 0
    %637 = vmatpush2.bf16.msra.mxu0 %v489
    %638 = vmatprep.subr.bf16.mxu0 0
    %639 = vmatpush2.bf16.msra.mxu0 %v488
    %640 = vmatprep.mubr.bf16.mxu0 %v209
    %641 = vmatmul.mubr.bf16.gmra.mxu0 %v208
    %v642 = vpop.f32.mrf.mxu0
    %v643 = vadd.f32 0.0, %v642
    %v644 = vpop.f32.mrf.mxu0
    %v645 = vpop.f32.mrf.mxu0
    %v646 = vpop.f32.mrf.mxu0
    %647 = vdwg.mxu0
    %648 = vmatprep.subr.bf16.mxu0 0
    %649 = vmatpush1.bf16.msra.mxu0 %v503
    %650 = vmatprep.subr.bf16.mxu0 0
    %651 = vmatpush1.bf16.msra.mxu0 %v502
    %652 = vmatprep.subr.bf16.mxu0 0
    %653 = vmatpush1.bf16.msra.mxu0 %v501
    %654 = vmatprep.subr.bf16.mxu0 0
    %655 = vmatpush1.bf16.msra.mxu0 %v500
    %656 = vmatprep.subr.bf16.mxu0 0
    %657 = vmatpush1.bf16.msra.mxu0 %v499
    %658 = vmatprep.subr.bf16.mxu0 0
    %659 = vmatpush1.bf16.msra.mxu0 %v498
    %660 = vmatprep.subr.bf16.mxu0 0
    %661 = vmatpush1.bf16.msra.mxu0 %v497
    %662 = vmatprep.subr.bf16.mxu0 0
    %663 = vmatpush1.bf16.msra.mxu0 %v496
    %664 = vmatprep.subr.bf16.mxu0 0
    %665 = vmatpush2.bf16.msra.mxu0 %v511
    %666 = vmatprep.subr.bf16.mxu0 0
    %667 = vmatpush2.bf16.msra.mxu0 %v510
    %668 = vmatprep.subr.bf16.mxu0 0
    %669 = vmatpush2.bf16.msra.mxu0 %v509
    %670 = vmatprep.subr.bf16.mxu0 0
    %671 = vmatpush2.bf16.msra.mxu0 %v508
    %672 = vmatprep.subr.bf16.mxu0 0
    %673 = vmatpush2.bf16.msra.mxu0 %v507
    %674 = vmatprep.subr.bf16.mxu0 0
    %675 = vmatpush2.bf16.msra.mxu0 %v506
    %676 = vmatprep.subr.bf16.mxu0 0
    %677 = vmatpush2.bf16.msra.mxu0 %v505
    %678 = vmatprep.subr.bf16.mxu0 0
    %679 = vmatpush2.bf16.msra.mxu0 %v504
    %680 = vmatprep.mubr.bf16.mxu0 %v211
    %681 = vmatmul.mubr.bf16.gmra.mxu0 %v210
    %v682 = vpop.f32.mrf.mxu0
    %v683 = vadd.f32 %v643, %v682
    %v684 = vpop.f32.mrf.mxu0
    %v685 = vpop.f32.mrf.mxu0
    %v686 = vpop.f32.mrf.mxu0
    %687 = vdwg.mxu0
    %688 = vmatprep.subr.bf16.mxu0 0
    %689 = vmatpush1.bf16.msra.mxu0 %v519
    %690 = vmatprep.subr.bf16.mxu0 0
    %691 = vmatpush1.bf16.msra.mxu0 %v518
    %692 = vmatprep.subr.bf16.mxu0 0
    %693 = vmatpush1.bf16.msra.mxu0 %v517
    %694 = vmatprep.subr.bf16.mxu0 0
    %695 = vmatpush1.bf16.msra.mxu0 %v516
    %696 = vmatprep.subr.bf16.mxu0 0
    %697 = vmatpush1.bf16.msra.mxu0 %v515
    %698 = vmatprep.subr.bf16.mxu0 0
    %699 = vmatpush1.bf16.msra.mxu0 %v514
    %700 = vmatprep.subr.bf16.mxu0 0
    %701 = vmatpush1.bf16.msra.mxu0 %v513
    %702 = vmatprep.subr.bf16.mxu0 0
    %703 = vmatpush1.bf16.msra.mxu0 %v512
    %704 = vmatprep.subr.bf16.mxu0 0
    %705 = vmatpush2.bf16.msra.mxu0 %v527
    %706 = vmatprep.subr.bf16.mxu0 0
    %707 = vmatpush2.bf16.msra.mxu0 %v526
    %708 = vmatprep.subr.bf16.mxu0 0
    %709 = vmatpush2.bf16.msra.mxu0 %v525
    %710 = vmatprep.subr.bf16.mxu0 0
    %711 = vmatpush2.bf16.msra.mxu0 %v524
    %712 = vmatprep.subr.bf16.mxu0 0
    %713 = vmatpush2.bf16.msra.mxu0 %v523
    %714 = vmatprep.subr.bf16.mxu0 0
    %715 = vmatpush2.bf16.msra.mxu0 %v522
    %716 = vmatprep.subr.bf16.mxu0 0
    %717 = vmatpush2.bf16.msra.mxu0 %v521
    %718 = vmatprep.subr.bf16.mxu0 0
    %719 = vmatpush2.bf16.msra.mxu0 %v520
    %720 = vmatprep.mubr.bf16.mxu0 %v213
    %721 = vmatmul.mubr.bf16.gmra.mxu0 %v212
    %v722 = vpop.f32.mrf.mxu0
    %v723 = vadd.f32 %v683, %v722
    %v724 = vpop.f32.mrf.mxu0
    %v725 = vpop.f32.mrf.mxu0
    %v726 = vpop.f32.mrf.mxu0
    %727 = vdwg.mxu0
    %728 = vmatprep.subr.bf16.mxu0 0
    %729 = vmatpush1.bf16.msra.mxu0 %v535
    %730 = vmatprep.subr.bf16.mxu0 0
    %731 = vmatpush1.bf16.msra.mxu0 %v534
    %732 = vmatprep.subr.bf16.mxu0 0
    %733 = vmatpush1.bf16.msra.mxu0 %v533
    %734 = vmatprep.subr.bf16.mxu0 0
    %735 = vmatpush1.bf16.msra.mxu0 %v532
    %736 = vmatprep.subr.bf16.mxu0 0
    %737 = vmatpush1.bf16.msra.mxu0 %v531
    %738 = vmatprep.subr.bf16.mxu0 0
    %739 = vmatpush1.bf16.msra.mxu0 %v530
    %740 = vmatprep.subr.bf16.mxu0 0
    %741 = vmatpush1.bf16.msra.mxu0 %v529
    %742 = vmatprep.subr.bf16.mxu0 0
    %743 = vmatpush1.bf16.msra.mxu0 %v528
    %744 = vmatprep.subr.bf16.mxu0 0
    %745 = vmatpush2.bf16.msra.mxu0 %v543
    %746 = vmatprep.subr.bf16.mxu0 0
    %747 = vmatpush2.bf16.msra.mxu0 %v542
    %748 = vmatprep.subr.bf16.mxu0 0
    %749 = vmatpush2.bf16.msra.mxu0 %v541
    %750 = vmatprep.subr.bf16.mxu0 0
    %751 = vmatpush2.bf16.msra.mxu0 %v540
    %752 = vmatprep.subr.bf16.mxu0 0
    %753 = vmatpush2.bf16.msra.mxu0 %v539
    %754 = vmatprep.subr.bf16.mxu0 0
    %755 = vmatpush2.bf16.msra.mxu0 %v538
    %756 = vmatprep.subr.bf16.mxu0 0
    %757 = vmatpush2.bf16.msra.mxu0 %v537
    %758 = vmatprep.subr.bf16.mxu0 0
    %759 = vmatpush2.bf16.msra.mxu0 %v536
    %760 = vmatprep.mubr.bf16.mxu0 %v215
    %761 = vmatmul.mubr.bf16.gmra.mxu0 %v214
    %v762 = vpop.f32.mrf.mxu0
    %v763 = vadd.f32 %v723, %v762
    %v764 = vpop.f32.mrf.mxu0
    %v765 = vpop.f32.mrf.mxu0
    %v766 = vpop.f32.mrf.mxu0
    %767 = vdwg.mxu0
    %v768 = vadd.f32 %v63, %v763
    %769 = vst [vmem:[#allocation2] sm:$0xff] %v768
    // Predicated region
    $region30: #{tpu_custom_call.1} parent=1 // pred_check
      %p770 = pneg %p50
    $region31: #{tpu_custom_call.1} parent=1 // pred_check_branch
      %772 = sbr.rel (%p770) target = $region33
    $region32: #{tpu_custom_call.1} parent=1 // pred_region
      %v773 = vld [vmem:[#allocation2] sm:$0xff]
      %v774 = vpack.c.bf16 %v773, %v773
      %775 = vst [vmem:[#allocation11] sm:$0xf] %v774
      %776 = vmax.xlane.f32.xlu0 %v773
      %v777 = vpop.xlane.xlu0 %776
      %v778 = vsub.f32 %v773, %v777
      %v779 = vmul.f32 %v778, 1.442695
      %v780 = vpow.pop %v779
      %781 = vadd.xlane.f32.xlu0 %v780
      %v782 = vpop.xlane.xlu0 %781
      %v783 = vlog2.pop %v782
      %v784 = vmul.f32 %v783, 0.6931472
      %v785 = vlaneseq
      %v786 = vand.u32 %v785, 127
      %v787 = vld [vmem:[%s4] sm:$0xff]
      %788 = vset.pattern.permute.xlu0 0
      %789 = vperm.xlu0 %788, %v787
      %v790 = vpop.permute.xlu0 %789
      %vm791 = vcmp.eq.s32.totalorder %v786, %v790
      %v792 = vsel %vm791, %v778, 0.0
      %793 = vadd.xlane.f32.xlu0 %v792
      %v794 = vpop.xlane.xlu0 %793
      %v795 = vsub.f32 %v784, %v794
      %s796 = smul.u32 0, 8
      %v797 = vlaneseq
      %v798 = vshrl.u32 %v797, 7
      %v799 = vstv %s796
      %v800 = vadd.s32 %v799, %v798
      %s801 = sld [smem:[#allocation4]]
      %v802 = vstv %s801
      %vm803 = vcmp.lt.s32.totalorder %v800, %v802
      %v804 = vsel %vm803, 1, 0
      %v805 = vcvt.s32.f32 %v804
      %v806 = vmul.f32 %v795, %v805
      %vm807 = vcmask 7168
      %v808 = vsel %vm807, %v806, 0.0
      %809 = vadd.xlane.f32.xlu0 %v808
      %v810 = vpop.xlane.xlu0 %809
      %v811 = vrot.slane %v810, 4
      %v812 = vadd.f32 %v810, %v811
      %v813 = vrot.slane %v812, 2
      %v814 = vadd.f32 %v812, %v813
      %v815 = vrot.slane %v814, 1
      %v816 = vadd.f32 %v814, %v815
      %s817 = vtos %v816
      %s818 = scalar_lea.smem [#allocation12], 0
      %819 = sst [smem:[%s818]] %s817
    $region33: #{tpu_custom_call.1} parent=1 // pred_fallthru
      _
    // Predicated region
    $region34: #{tpu_custom_call.1} parent=1 // pred_check
      _
    $region35: #{tpu_custom_call.1} parent=1 // pred_check_branch
      %821 = sbr.rel (0) target = $region37
    $region36: #{tpu_custom_call.1} parent=1 // pred_region
      %s823 = ssub.s32 64, 64
      %824 = vsyncadd [#allocation7], %s823
      %s826 = sshll.u32 [#allocation11], 4
      %s827 = int_to_ptr.vmem [resolvable:$true] %s826
      %829 = dma.vmem_to_hbm [thread:$0]  %s827, 64, %s5, [#allocation7]
    $region37: #{tpu_custom_call.1} parent=1 // pred_fallthru
      _
    // Predicated region
    $region38: #{tpu_custom_call.1} parent=1 // pred_check
      _
    $region39: #{tpu_custom_call.1} parent=1 // pred_check_branch
      %831 = sbr.rel (0) target = $region41
    $region40: #{tpu_custom_call.1} parent=1 // pred_region
      %s833 = ssub.s32 16, 16
      %834 = vsyncadd [#allocation8], %s833
      %837 = dma.smem_to_hbm [#allocation12], 16, %s6, [#allocation8]
    $region41: #{tpu_custom_call.1} parent=1 // pred_fallthru
      _
    // Predicated region
    $region42: #{tpu_custom_call.1} parent=1 // pred_check
      _
    $region43: #{tpu_custom_call.1} parent=1 // pred_check_branch
      %839 = sbr.rel (0) target = $region45
    $region44: #{tpu_custom_call.1} parent=1 // pred_region
      %840 = dma.done [#allocation7], 64
    $region45: #{tpu_custom_call.1} parent=1 // pred_fallthru
      _
    // Predicated region
    $region46: #{tpu_custom_call.1} parent=1 // pred_check
      _
    $region47: #{tpu_custom_call.1} parent=1 // pred_check_branch
      %842 = sbr.rel (0) target = $region49
    $region48: #{tpu_custom_call.1} parent=1 // pred_region
      %843 = dma.done [#allocation8], 16
    $region49: #{tpu_custom_call.1} parent=1 // pred_fallthru
      _
    %844 = sfence
    %845 = vsyncpa [#allocation6], 1
    %846 = vsyncpa [#allocation10], 1
    %847 = vsyncpa [#allocation7], 1
    %848 = vsyncpa [#allocation8], 1

</llo_original>
